<compile_context>
chip_gen: v6e
topology: v6e:2x2x1
jax: 0.10.0
libtpu: 0.0.40
codegen_flags: <defaults>
</compile_context>

<pallas_src>
import jax
import jax.numpy as jnp
from jax.experimental import pallas as pl
from jax.experimental.pallas import tpu as pltpu

LANE = 128
SUBLANE = 8
HIDDEN = 256


def _round_up(n, m):
    return ((n + m - 1) // m) * m


def mlp_kernel(x_ref, w1_ref, b1_ref, w2_ref, b2_ref,
               w3_ref, b3_ref, w4_ref, b4_ref, o_ref):
    """4-layer MLP on one (tile_b, C_pad) batch tile.

    Matmuls run on the MXU in the weights' dtype (bf16 by default) with f32
    accumulation; bias-add + ReLU are done in f32 on the VPU, then the
    activation is cast back down for the next MXU pass.
    """
    cdt = w1_ref.dtype

    h = jnp.dot(x_ref[...], w1_ref[...], preferred_element_type=jnp.float32)
    h = jnp.maximum(h + b1_ref[...], 0.0).astype(cdt)

    h = jnp.dot(h, w2_ref[...], preferred_element_type=jnp.float32)
    h = jnp.maximum(h + b2_ref[...], 0.0).astype(cdt)

    h = jnp.dot(h, w3_ref[...], preferred_element_type=jnp.float32)
    h = jnp.maximum(h + b3_ref[...], 0.0).astype(cdt)

    h = jnp.dot(h, w4_ref[...], preferred_element_type=jnp.float32) + b4_ref[...]
    o_ref[...] = h.astype(o_ref.dtype)


def net_forward(x, params, *, tile_b=256, compute_dtype=jnp.bfloat16):
    """Pallas implementation of Net.forward.

    x:       (B, num_channels) float32
    params:  dict with w1..w4 stored transposed vs PyTorch, i.e. (in, out),
             and b1..b4 as (1, out), all float32.
    returns: (B, num_quantiles) float32

    tile_b is the batch tile size: keep it large (128..512, ideally a multiple
    of 256 on v6e/v7x).  It is clamped to the (sublane-rounded) batch size for
    tiny inputs.
    """
    B, C = x.shape
    Q = params["w4"].shape[1]

    # --- lane-dense padding (done once in the wrapper, mathematically a no-op)
    C_pad = _round_up(C, LANE)   # full-width K for the first MXU pass
    Q_pad = _round_up(Q, LANE)   # unmasked lane-dense output store

    x_p = x.astype(compute_dtype)
    if C_pad != C:
        x_p = jnp.pad(x_p, ((0, 0), (0, C_pad - C)))

    w1 = params["w1"]
    if C_pad != C:
        w1 = jnp.pad(w1, ((0, C_pad - C), (0, 0)))       # zero rows contribute 0
    w4, b4 = params["w4"], params["b4"]
    if Q_pad != Q:
        w4 = jnp.pad(w4, ((0, 0), (0, Q_pad - Q)))
        b4 = jnp.pad(b4, ((0, 0), (0, Q_pad - Q)))

    # Weights in compute_dtype (bf16 by default) for the MXU; biases stay f32
    # so bias-add + ReLU are native f32 VPU ops on every TPU generation.
    w1 = w1.astype(compute_dtype)
    w2 = params["w2"].astype(compute_dtype)
    w3 = params["w3"].astype(compute_dtype)
    w4 = w4.astype(compute_dtype)
    b1, b2, b3 = params["b1"], params["b2"], params["b3"]
    b4 = b4.astype(jnp.float32)

    # --- batch tiling --------------------------------------------------------
    tb = max(SUBLANE, min(tile_b, _round_up(B, SUBLANE)))
    tb = _round_up(tb, SUBLANE)
    grid = (pl.cdiv(B, tb),)

    def full(arr):
        # Constant index_map: whole array resident for every batch tile.
        # TODO(synk): pipeline_mode=pl.Buffered(1) would drop the redundant
        # double-buffer (~0.5 MiB); omitted to keep lowering portable.
        return pl.BlockSpec(arr.shape, lambda i: (0, 0))

    in_specs = [
        pl.BlockSpec((tb, C_pad), lambda i: (i, 0)),      # streamed x tile
        full(w1), full(b1),
        full(w2), full(b2),
        full(w3), full(b3),
        full(w4), full(b4),
    ]
    out_spec = pl.BlockSpec((tb, Q_pad), lambda i: (i, 0))

    out_padded = pl.pallas_call(
        mlp_kernel,
        out_shape=jax.ShapeDtypeStruct((B, Q_pad), jnp.float32),
        grid_spec=pltpu.PrefetchScalarGridSpec(
            num_scalar_prefetch=0,
            grid=grid,
            in_specs=in_specs,
            out_specs=out_spec,
        ),
        compiler_params=pltpu.CompilerParams(
            dimension_semantics=("parallel",),     # megacore / dual-TC sharding
            vmem_limit_bytes=32 * 1024 * 1024,     # explicit; fits v7x 64 MiB
        ),
    )(x_p, w1, b1, w2, b2, w3, b3, w4, b4)

    return out_padded[:, :Q]


def init_params(key, num_channels, num_quantiles, hidden=HIDDEN):
    """Deterministic init mimicking nn.Linear (uniform +/- 1/sqrt(fan_in))."""
    dims = [(num_channels, hidden), (hidden, hidden),
            (hidden, hidden), (hidden, num_quantiles)]
    params = {}
    for idx, (fan_in, fan_out) in enumerate(dims, start=1):
        key, kw, kb = jax.random.split(key, 3)
        bound = 1.0 / (fan_in ** 0.5)
        params[f"w{idx}"] = jax.random.uniform(
            kw, (fan_in, fan_out), jnp.float32, -bound, bound)
        params[f"b{idx}"] = jax.random.uniform(
            kb, (1, fan_out), jnp.float32, -bound, bound)
    return params


def reference_forward(x, params):
    h = x
    for idx in range(1, 4):
        h = jnp.maximum(h @ params[f"w{idx}"] + params[f"b{idx}"], 0.0)
    return h @ params["w4"] + params["b4"]


if __name__ == "__main__":
    num_channels = 32
    num_quantiles = 16
    batch = 8

    key = jax.random.PRNGKey(0)
    key, kx = jax.random.split(key)
    x = jax.random.normal(kx, (batch, num_channels), jnp.float32)
    params = init_params(key, num_channels, num_quantiles)

    ref = reference_forward(x, params)

    # Exact-math path (f32 weights on the MXU): tight tolerance.
    out_f32 = jax.block_until_ready(
        net_forward(x, params, compute_dtype=jnp.float32))
    assert out_f32.shape == (batch, num_quantiles)
    assert jnp.allclose(out_f32, ref, atol=1e-4, rtol=1e-4), "f32 mismatch vs reference"

    # Default fast path (bf16 on the MXU, f32 accumulation): bf16 tolerance.
    out_bf16 = jax.block_until_ready(net_forward(x, params))
    assert out_bf16.shape == (batch, num_quantiles)
    assert jnp.allclose(out_bf16, ref, atol=5e-2, rtol=5e-2), "bf16 mismatch vs reference"

    print("KERNEL_OK")
</pallas_src>

<mosaic_0001>
module attributes {stable_mosaic.version = 11 : i64} {
  func.func @mlp_kernel(%arg0: i32, %arg1: memref<8x128xf32, #tpu.memory_space<vmem>>, %arg2: memref<128x256xf32, #tpu.memory_space<vmem>>, %arg3: memref<1x256xf32, #tpu.memory_space<vmem>>, %arg4: memref<256x256xf32, #tpu.memory_space<vmem>>, %arg5: memref<1x256xf32, #tpu.memory_space<vmem>>, %arg6: memref<256x256xf32, #tpu.memory_space<vmem>>, %arg7: memref<1x256xf32, #tpu.memory_space<vmem>>, %arg8: memref<256x128xf32, #tpu.memory_space<vmem>>, %arg9: memref<1x128xf32, #tpu.memory_space<vmem>>, %arg10: memref<8x128xf32, #tpu.memory_space<vmem>>) attributes {dimension_semantics = [#tpu.dimension_semantics<parallel>], iteration_bounds = array<i64: 1>, scalar_prefetch = 0 : i64, scratch_operands = 0 : i64, tpu.core_type = #tpu.core_type<tc>, window_params = [{transform_indices = @transform_0, window_bounds = array<i64: 8, 128>}, {pipeline_mode = #tpu.pipeline_mode<synchronous>, transform_indices = @transform_1, window_bounds = array<i64: 128, 256>}, {pipeline_mode = #tpu.pipeline_mode<synchronous>, transform_indices = @transform_2, window_bounds = array<i64: 1, 256>}, {pipeline_mode = #tpu.pipeline_mode<synchronous>, transform_indices = @transform_3, window_bounds = array<i64: 256, 256>}, {pipeline_mode = #tpu.pipeline_mode<synchronous>, transform_indices = @transform_4, window_bounds = array<i64: 1, 256>}, {pipeline_mode = #tpu.pipeline_mode<synchronous>, transform_indices = @transform_5, window_bounds = array<i64: 256, 256>}, {pipeline_mode = #tpu.pipeline_mode<synchronous>, transform_indices = @transform_6, window_bounds = array<i64: 1, 256>}, {pipeline_mode = #tpu.pipeline_mode<synchronous>, transform_indices = @transform_7, window_bounds = array<i64: 256, 128>}, {pipeline_mode = #tpu.pipeline_mode<synchronous>, transform_indices = @transform_8, window_bounds = array<i64: 1, 128>}, {transform_indices = @transform_9, window_bounds = array<i64: 8, 128>}]} {
    %c0 = arith.constant 0 : index
    %c0_0 = arith.constant 0 : index
    %0 = vector.load %arg1[%c0, %c0_0] : memref<8x128xf32, #tpu.memory_space<vmem>>, vector<8x128xf32>
    %c0_1 = arith.constant 0 : index
    %c0_2 = arith.constant 0 : index
    %1 = vector.load %arg2[%c0_1, %c0_2] : memref<128x256xf32, #tpu.memory_space<vmem>>, vector<128x256xf32>
    %cst = arith.constant dense<0.000000e+00> : vector<8x256xf32>
    %2 = tpu.matmul %0, %1, %cst {dimension_numbers = #tpu.dot_dimension_numbers<[1], [0], [0], [1], [0, 0, 1, 1], [], []>} : vector<8x128xf32>, vector<128x256xf32>, vector<8x256xf32> -> vector<8x256xf32>
    %c0_3 = arith.constant 0 : index
    %c0_4 = arith.constant 0 : index
    %3 = vector.load %arg3[%c0_3, %c0_4] : memref<1x256xf32, #tpu.memory_space<vmem>>, vector<1x256xf32>
    %4 = vector.broadcast %3 : vector<1x256xf32> to vector<8x256xf32>
    %5 = arith.addf %2, %4 : vector<8x256xf32>
    %cst_5 = arith.constant 0.000000e+00 : f32
    %6 = vector.broadcast %cst_5 : f32 to vector<8x256xf32>
    %7 = arith.maximumf %5, %6 : vector<8x256xf32>
    %c0_6 = arith.constant 0 : index
    %c0_7 = arith.constant 0 : index
    %8 = vector.load %arg4[%c0_6, %c0_7] : memref<256x256xf32, #tpu.memory_space<vmem>>, vector<256x256xf32>
    %cst_8 = arith.constant dense<0.000000e+00> : vector<8x256xf32>
    %9 = tpu.matmul %7, %8, %cst_8 {dimension_numbers = #tpu.dot_dimension_numbers<[1], [0], [0], [1], [0, 0, 1, 1], [], []>} : vector<8x256xf32>, vector<256x256xf32>, vector<8x256xf32> -> vector<8x256xf32>
    %c0_9 = arith.constant 0 : index
    %c0_10 = arith.constant 0 : index
    %10 = vector.load %arg5[%c0_9, %c0_10] : memref<1x256xf32, #tpu.memory_space<vmem>>, vector<1x256xf32>
    %11 = vector.broadcast %10 : vector<1x256xf32> to vector<8x256xf32>
    %12 = arith.addf %9, %11 : vector<8x256xf32>
    %cst_11 = arith.constant 0.000000e+00 : f32
    %13 = vector.broadcast %cst_11 : f32 to vector<8x256xf32>
    %14 = arith.maximumf %12, %13 : vector<8x256xf32>
    %c0_12 = arith.constant 0 : index
    %c0_13 = arith.constant 0 : index
    %15 = vector.load %arg6[%c0_12, %c0_13] : memref<256x256xf32, #tpu.memory_space<vmem>>, vector<256x256xf32>
    %cst_14 = arith.constant dense<0.000000e+00> : vector<8x256xf32>
    %16 = tpu.matmul %14, %15, %cst_14 {dimension_numbers = #tpu.dot_dimension_numbers<[1], [0], [0], [1], [0, 0, 1, 1], [], []>} : vector<8x256xf32>, vector<256x256xf32>, vector<8x256xf32> -> vector<8x256xf32>
    %c0_15 = arith.constant 0 : index
    %c0_16 = arith.constant 0 : index
    %17 = vector.load %arg7[%c0_15, %c0_16] : memref<1x256xf32, #tpu.memory_space<vmem>>, vector<1x256xf32>
    %18 = vector.broadcast %17 : vector<1x256xf32> to vector<8x256xf32>
    %19 = arith.addf %16, %18 : vector<8x256xf32>
    %cst_17 = arith.constant 0.000000e+00 : f32
    %20 = vector.broadcast %cst_17 : f32 to vector<8x256xf32>
    %21 = arith.maximumf %19, %20 : vector<8x256xf32>
    %c0_18 = arith.constant 0 : index
    %c0_19 = arith.constant 0 : index
    %22 = vector.load %arg8[%c0_18, %c0_19] : memref<256x128xf32, #tpu.memory_space<vmem>>, vector<256x128xf32>
    %cst_20 = arith.constant dense<0.000000e+00> : vector<8x128xf32>
    %23 = tpu.matmul %21, %22, %cst_20 {dimension_numbers = #tpu.dot_dimension_numbers<[1], [0], [0], [1], [0, 0, 1, 1], [], []>} : vector<8x256xf32>, vector<256x128xf32>, vector<8x128xf32> -> vector<8x128xf32>
    %c0_21 = arith.constant 0 : index
    %c0_22 = arith.constant 0 : index
    %24 = vector.load %arg9[%c0_21, %c0_22] : memref<1x128xf32, #tpu.memory_space<vmem>>, vector<1x128xf32>
    %25 = vector.broadcast %24 : vector<1x128xf32> to vector<8x128xf32>
    %26 = arith.addf %23, %25 : vector<8x128xf32>
    %c0_23 = arith.constant 0 : index
    %c0_24 = arith.constant 0 : index
    %27 = vector.load %arg10[%c0_23, %c0_24] : memref<8x128xf32, #tpu.memory_space<vmem>>, vector<8x128xf32>
    tpu.vector_store %arg10[%c0_23, %c0_24], %26 {strides = array<i32>} : memref<8x128xf32, #tpu.memory_space<vmem>>, vector<8x128xf32>,
    return
  }
  func.func @transform_0(%arg0: i32) -> (i32, i32) {
    %c0_i32 = arith.constant 0 : i32
    %c0_i32_0 = arith.constant 0 : i32
    return %arg0, %c0_i32 : i32, i32
  }
  func.func @transform_1(%arg0: i32) -> (i32, i32) {
    %c0_i32 = arith.constant 0 : i32
    %c0_i32_0 = arith.constant 0 : i32
    %c0_i32_1 = arith.constant 0 : i32
    return %c0_i32, %c0_i32_0 : i32, i32
  }
  func.func @transform_2(%arg0: i32) -> (i32, i32) {
    %c0_i32 = arith.constant 0 : i32
    %c0_i32_0 = arith.constant 0 : i32
    %c0_i32_1 = arith.constant 0 : i32
    return %c0_i32, %c0_i32_0 : i32, i32
  }
  func.func @transform_3(%arg0: i32) -> (i32, i32) {
    %c0_i32 = arith.constant 0 : i32
    %c0_i32_0 = arith.constant 0 : i32
    %c0_i32_1 = arith.constant 0 : i32
    return %c0_i32, %c0_i32_0 : i32, i32
  }
  func.func @transform_4(%arg0: i32) -> (i32, i32) {
    %c0_i32 = arith.constant 0 : i32
    %c0_i32_0 = arith.constant 0 : i32
    %c0_i32_1 = arith.constant 0 : i32
    return %c0_i32, %c0_i32_0 : i32, i32
  }
  func.func @transform_5(%arg0: i32) -> (i32, i32) {
    %c0_i32 = arith.constant 0 : i32
    %c0_i32_0 = arith.constant 0 : i32
    %c0_i32_1 = arith.constant 0 : i32
    return %c0_i32, %c0_i32_0 : i32, i32
  }
  func.func @transform_6(%arg0: i32) -> (i32, i32) {
    %c0_i32 = arith.constant 0 : i32
    %c0_i32_0 = arith.constant 0 : i32
    %c0_i32_1 = arith.constant 0 : i32
    return %c0_i32, %c0_i32_0 : i32, i32
  }
  func.func @transform_7(%arg0: i32) -> (i32, i32) {
    %c0_i32 = arith.constant 0 : i32
    %c0_i32_0 = arith.constant 0 : i32
    %c0_i32_1 = arith.constant 0 : i32
    return %c0_i32, %c0_i32_0 : i32, i32
  }
  func.func @transform_8(%arg0: i32) -> (i32, i32) {
    %c0_i32 = arith.constant 0 : i32
    %c0_i32_0 = arith.constant 0 : i32
    %c0_i32_1 = arith.constant 0 : i32
    return %c0_i32, %c0_i32_0 : i32, i32
  }
  func.func @transform_9(%arg0: i32) -> (i32, i32) {
    %c0_i32 = arith.constant 0 : i32
    %c0_i32_0 = arith.constant 0 : i32
    return %arg0, %c0_i32 : i32, i32
  }
}

</mosaic_0001>

<llo_original>
// kernel: tpu_custom_call.1
$region0: #{tpu_custom_call.1}
  #allocation0 [shape = 'u32[]', space=smem, size = 0x4, offset = 0x4, fixed_abs, tag = 'smem constant byte address 0x4 - core index']
  #allocation1 [shape = 'u32[144,128]{1,0:T(1,128)}', space=vmem, size = 0x12000, scoped, tag = 'internal scratch']
  %s0 = inlined_call_operand.hbm [shape: f32[8,128], index: 0, kind: input, shape index: {}]
  %s1 = inlined_call_operand.hbm [shape: f32[128,256], index: 1, kind: input, shape index: {}]
  %s2 = inlined_call_operand.vmem [shape: f32[1,256], index: 2, kind: input, shape index: {}]
  %s3 = inlined_call_operand.hbm [shape: f32[256,256], index: 3, kind: input, shape index: {}]
  %s4 = inlined_call_operand.vmem [shape: f32[1,256], index: 4, kind: input, shape index: {}]
  %s5 = inlined_call_operand.hbm [shape: f32[256,256], index: 5, kind: input, shape index: {}]
  %s6 = inlined_call_operand.vmem [shape: f32[1,256], index: 6, kind: input, shape index: {}]
  %s7 = inlined_call_operand.hbm [shape: f32[256,128], index: 7, kind: input, shape index: {}]
  %s8 = inlined_call_operand.vmem [shape: f32[1,128], index: 8, kind: input, shape index: {}]
  %s9 = inlined_call_operand.hbm [shape: f32[8,128], index: 9, kind: output, shape index: {}]
  %s10 = sld [smem:[#allocation0]]
  $region66: #{tpu_custom_call.1} parent=0
    _
  %s12 = ssub.s32 1, %s10
  %s13 = scalar_select 0, %s12, %s10
  $region1: #{tpu_custom_call.1} parent=0
    #allocation2 [shape = 'u8[4096]{0}', space=vmem, size = 0x1000, scoped, tag = 'input window, operand 0, single buffered']
    #allocation3 [shape = 's32[1]{0}', space=sflag, size = 0x4, scoped, tag = 'scoped memory for tpu_custom_call.1']
    #allocation4 [shape = 's32[1]{0}', space=sflag, size = 0x4, scoped, tag = 'scoped memory for tpu_custom_call.1']
    #allocation5 [shape = 'u8[131072]{0}', space=vmem, size = 0x20000, scoped, tag = 'input window, operand 1, single buffered']
    #allocation6 [shape = 's32[1]{0}', space=sflag, size = 0x4, scoped, tag = 'scoped memory for tpu_custom_call.1']
    #allocation7 [shape = 'u8[262144]{0}', space=vmem, size = 0x40000, scoped, tag = 'input window, operand 3, single buffered']
    #allocation8 [shape = 'u8[262144]{0}', space=vmem, size = 0x40000, scoped, tag = 'input window, operand 5, single buffered']
    #allocation9 [shape = 's32[1]{0}', space=sflag, size = 0x4, scoped, tag = 'scoped memory for tpu_custom_call.1']
    #allocation10 [shape = 'u8[131072]{0}', space=vmem, size = 0x20000, scoped, tag = 'input window, operand 7, single buffered']
    #allocation11 [shape = 'u8[4096]{0}', space=vmem, size = 0x1000, scoped, tag = 'output window, operand 0, single buffered']
    %14 = vsyncpa [#allocation3], 0
    %15 = vsyncpa [#allocation6], 0
    %16 = vsyncpa [#allocation9], 0
    %17 = vsyncpa [#allocation4], 0
    // Predicated region
    $region2: #{tpu_custom_call.1} parent=1 // pred_check
      _
    $region3: #{tpu_custom_call.1} parent=1 // pred_check_branch
      %19 = sbr.rel (0) target = $region5
    $region4: #{tpu_custom_call.1} parent=1 // pred_region
      %s21 = ssub.s32 128, 128
      %22 = vsyncadd [#allocation3], %s21
      %s24 = sshll.u32 [#allocation2], 4
      %s25 = int_to_ptr.vmem [resolvable:$true] %s24
      %27 = dma.hbm_to_vmem [thread:$0]  %s0, 128, %s25, [#allocation3]
    $region5: #{tpu_custom_call.1} parent=1 // pred_fallthru
      _
    // Predicated region
    $region6: #{tpu_custom_call.1} parent=1 // pred_check
      _
    $region7: #{tpu_custom_call.1} parent=1 // pred_check_branch
      %29 = sbr.rel (0) target = $region9
    $region8: #{tpu_custom_call.1} parent=1 // pred_region
      %s31 = ssub.s32 4096, 4096
      %32 = vsyncadd [#allocation6], %s31
      %s33 = sshll.u32 [#allocation5], 4
      %s34 = int_to_ptr.vmem [resolvable:$true] %s33
      %39 = dma.hbm_to_vmem [thread:$0]  %s1, 4096, %s34, [#allocation6], 256, 256, 16
    $region9: #{tpu_custom_call.1} parent=1 // pred_fallthru
      _
    // Predicated region
    $region10: #{tpu_custom_call.1} parent=1 // pred_check
      _
    $region11: #{tpu_custom_call.1} parent=1 // pred_check_branch
      %41 = sbr.rel (0) target = $region13
    $region12: #{tpu_custom_call.1} parent=1 // pred_region
      _
    $region13: #{tpu_custom_call.1} parent=1 // pred_fallthru
      _
    // Predicated region
    $region14: #{tpu_custom_call.1} parent=1 // pred_check
      _
    $region15: #{tpu_custom_call.1} parent=1 // pred_check_branch
      %43 = sbr.rel (0) target = $region17
    $region16: #{tpu_custom_call.1} parent=1 // pred_region
      %s45 = ssub.s32 8192, 8192
      %46 = vsyncadd [#allocation6], %s45
      %s47 = sshll.u32 [#allocation7], 4
      %s48 = int_to_ptr.vmem [resolvable:$true] %s47
      %53 = dma.hbm_to_vmem [thread:$0]  %s3, 8192, %s48, [#allocation6], 256, 256, 16
    $region17: #{tpu_custom_call.1} parent=1 // pred_fallthru
      _
    // Predicated region
    $region18: #{tpu_custom_call.1} parent=1 // pred_check
      _
    $region19: #{tpu_custom_call.1} parent=1 // pred_check_branch
      %55 = sbr.rel (0) target = $region21
    $region20: #{tpu_custom_call.1} parent=1 // pred_region
      _
    $region21: #{tpu_custom_call.1} parent=1 // pred_fallthru
      _
    // Predicated region
    $region22: #{tpu_custom_call.1} parent=1 // pred_check
      _
    $region23: #{tpu_custom_call.1} parent=1 // pred_check_branch
      %57 = sbr.rel (0) target = $region25
    $region24: #{tpu_custom_call.1} parent=1 // pred_region
      %s59 = ssub.s32 8192, 8192
      %60 = vsyncadd [#allocation9], %s59
      %s61 = sshll.u32 [#allocation8], 4
      %s62 = int_to_ptr.vmem [resolvable:$true] %s61
      %67 = dma.hbm_to_vmem [thread:$0]  %s5, 8192, %s62, [#allocation9], 256, 256, 16
    $region25: #{tpu_custom_call.1} parent=1 // pred_fallthru
      _
    // Predicated region
    $region26: #{tpu_custom_call.1} parent=1 // pred_check
      _
    $region27: #{tpu_custom_call.1} parent=1 // pred_check_branch
      %69 = sbr.rel (0) target = $region29
    $region28: #{tpu_custom_call.1} parent=1 // pred_region
      _
    $region29: #{tpu_custom_call.1} parent=1 // pred_fallthru
      _
    // Predicated region
    $region30: #{tpu_custom_call.1} parent=1 // pred_check
      _
    $region31: #{tpu_custom_call.1} parent=1 // pred_check_branch
      %71 = sbr.rel (0) target = $region33
    $region32: #{tpu_custom_call.1} parent=1 // pred_region
      %s73 = ssub.s32 4096, 4096
      %74 = vsyncadd [#allocation9], %s73
      %s75 = sshll.u32 [#allocation10], 4
      %s76 = int_to_ptr.vmem [resolvable:$true] %s75
      %81 = dma.hbm_to_vmem [thread:$0]  %s7, 4096, %s76, [#allocation9], 128, 128, 8
    $region33: #{tpu_custom_call.1} parent=1 // pred_fallthru
      _
    // Predicated region
    $region34: #{tpu_custom_call.1} parent=1 // pred_check
      _
    $region35: #{tpu_custom_call.1} parent=1 // pred_check_branch
      %83 = sbr.rel (0) target = $region37
    $region36: #{tpu_custom_call.1} parent=1 // pred_region
      _
    $region37: #{tpu_custom_call.1} parent=1 // pred_fallthru
      _
    // Predicated region
    $region38: #{tpu_custom_call.1} parent=1 // pred_check
      _
    $region39: #{tpu_custom_call.1} parent=1 // pred_check_branch
      %85 = sbr.rel (0) target = $region41
    $region40: #{tpu_custom_call.1} parent=1 // pred_region
      %86 = dma.done [#allocation3], 128
    $region41: #{tpu_custom_call.1} parent=1 // pred_fallthru
      _
    // Predicated region
    $region42: #{tpu_custom_call.1} parent=1 // pred_check
      _
    $region43: #{tpu_custom_call.1} parent=1 // pred_check_branch
      %88 = sbr.rel (0) target = $region45
    $region44: #{tpu_custom_call.1} parent=1 // pred_region
      %89 = dma.done [#allocation6], 4096
    $region45: #{tpu_custom_call.1} parent=1 // pred_fallthru
      _
    // Predicated region
    $region46: #{tpu_custom_call.1} parent=1 // pred_check
      _
    $region47: #{tpu_custom_call.1} parent=1 // pred_check_branch
      %91 = sbr.rel (0) target = $region49
    $region48: #{tpu_custom_call.1} parent=1 // pred_region
      %92 = dma.done [#allocation6], 8192
    $region49: #{tpu_custom_call.1} parent=1 // pred_fallthru
      _
    // Predicated region
    $region50: #{tpu_custom_call.1} parent=1 // pred_check
      _
    $region51: #{tpu_custom_call.1} parent=1 // pred_check_branch
      %94 = sbr.rel (0) target = $region53
    $region52: #{tpu_custom_call.1} parent=1 // pred_region
      %95 = dma.done [#allocation9], 8192
    $region53: #{tpu_custom_call.1} parent=1 // pred_fallthru
      _
    // Predicated region
    $region54: #{tpu_custom_call.1} parent=1 // pred_check
      _
    $region55: #{tpu_custom_call.1} parent=1 // pred_check_branch
      %97 = sbr.rel (0) target = $region57
    $region56: #{tpu_custom_call.1} parent=1 // pred_region
      %98 = dma.done [#allocation9], 4096
    $region57: #{tpu_custom_call.1} parent=1 // pred_fallthru
      _
    %v99 = vld [vmem:[#allocation2] sm:$0xff]
    %v100 = vld [vmem:[#allocation5] sm:$0xff]
    %v101 = vld [vmem:[#allocation5 + $0x8] sm:$0xff]
    %v102 = vld [vmem:[#allocation5 + $0x10] sm:$0xff]
    %v103 = vld [vmem:[#allocation5 + $0x18] sm:$0xff]
    %v104 = vld [vmem:[#allocation5 + $0x20] sm:$0xff]
    %v105 = vld [vmem:[#allocation5 + $0x28] sm:$0xff]
    %v106 = vld [vmem:[#allocation5 + $0x30] sm:$0xff]
    %v107 = vld [vmem:[#allocation5 + $0x38] sm:$0xff]
    %v108 = vld [vmem:[#allocation5 + $0x40] sm:$0xff]
    %v109 = vld [vmem:[#allocation5 + $0x48] sm:$0xff]
    %v110 = vld [vmem:[#allocation5 + $0x50] sm:$0xff]
    %v111 = vld [vmem:[#allocation5 + $0x58] sm:$0xff]
    %v112 = vld [vmem:[#allocation5 + $0x60] sm:$0xff]
    %v113 = vld [vmem:[#allocation5 + $0x68] sm:$0xff]
    %v114 = vld [vmem:[#allocation5 + $0x70] sm:$0xff]
    %v115 = vld [vmem:[#allocation5 + $0x78] sm:$0xff]
    %v116 = vld [vmem:[#allocation5 + $0x80] sm:$0xff]
    %v117 = vld [vmem:[#allocation5 + $0x88] sm:$0xff]
    %v118 = vld [vmem:[#allocation5 + $0x90] sm:$0xff]
    %v119 = vld [vmem:[#allocation5 + $0x98] sm:$0xff]
    %v120 = vld [vmem:[#allocation5 + $0xa0] sm:$0xff]
    %v121 = vld [vmem:[#allocation5 + $0xa8] sm:$0xff]
    %v122 = vld [vmem:[#allocation5 + $0xb0] sm:$0xff]
    %v123 = vld [vmem:[#allocation5 + $0xb8] sm:$0xff]
    %v124 = vld [vmem:[#allocation5 + $0xc0] sm:$0xff]
    %v125 = vld [vmem:[#allocation5 + $0xc8] sm:$0xff]
    %v126 = vld [vmem:[#allocation5 + $0xd0] sm:$0xff]
    %v127 = vld [vmem:[#allocation5 + $0xd8] sm:$0xff]
    %v128 = vld [vmem:[#allocation5 + $0xe0] sm:$0xff]
    %v129 = vld [vmem:[#allocation5 + $0xe8] sm:$0xff]
    %v130 = vld [vmem:[#allocation5 + $0xf0] sm:$0xff]
    %v131 = vld [vmem:[#allocation5 + $0xf8] sm:$0xff]
    %v132 = vld [vmem:[%s2] sm:$0x3]
    %v134 = vlaneseq
    %v135 = vshrl.u32 %v134, 7
    %v136 = vsub.s32 0, %v135
    %v137 = vrot.slane %v132, %v136
    %v138 = vlaneseq
    %v139 = vshrl.u32 %v138, 7
    %v140 = vsub.s32 1, %v139
    %v141 = vrot.slane %v132, %v140
    %144 = vmatprep.subr.mxu0 %v131
    %145 = vmatpush1.msra.mxu0 %v130
    %146 = vmatprep.subr.mxu0 %v129
    %147 = vmatpush1.msra.mxu0 %v128
    %148 = vmatprep.subr.mxu0 %v127
    %149 = vmatpush1.msra.mxu0 %v126
    %150 = vmatprep.subr.mxu0 %v125
    %151 = vmatpush1.msra.mxu0 %v124
    %152 = vmatprep.subr.mxu0 %v123
    %153 = vmatpush1.msra.mxu0 %v122
    %154 = vmatprep.subr.mxu0 %v121
    %155 = vmatpush1.msra.mxu0 %v120
    %156 = vmatprep.subr.mxu0 %v119
    %157 = vmatpush1.msra.mxu0 %v118
    %158 = vmatprep.subr.mxu0 %v117
    %159 = vmatpush1.msra.mxu0 %v116
    %160 = vmatprep.subr.mxu0 %v115
    %161 = vmatpush1.msra.mxu0 %v114
    %162 = vmatprep.subr.mxu0 %v113
    %163 = vmatpush1.msra.mxu0 %v112
    %164 = vmatprep.subr.mxu0 %v111
    %165 = vmatpush1.msra.mxu0 %v110
    %166 = vmatprep.subr.mxu0 %v109
    %167 = vmatpush1.msra.mxu0 %v108
    %168 = vmatprep.subr.mxu0 %v107
    %169 = vmatpush1.msra.mxu0 %v106
    %170 = vmatprep.subr.mxu0 %v105
    %171 = vmatpush1.msra.mxu0 %v104
    %172 = vmatprep.subr.mxu0 %v103
    %173 = vmatpush1.msra.mxu0 %v102
    %174 = vmatprep.subr.mxu0 %v101
    %175 = vmatpush1.msra.mxu0 %v100
    %176 = vmatprep.subr.mxu0 0.0
    %177 = vmatpush2.msra.mxu0 0.0
    %178 = vmatprep.subr.mxu0 0.0
    %179 = vmatpush2.msra.mxu0 0.0
    %180 = vmatprep.subr.mxu0 0.0
    %181 = vmatpush2.msra.mxu0 0.0
    %182 = vmatprep.subr.mxu0 0.0
    %183 = vmatpush2.msra.mxu0 0.0
    %184 = vmatprep.subr.mxu0 0.0
    %185 = vmatpush2.msra.mxu0 0.0
    %186 = vmatprep.subr.mxu0 0.0
    %187 = vmatpush2.msra.mxu0 0.0
    %188 = vmatprep.subr.mxu0 0.0
    %189 = vmatpush2.msra.mxu0 0.0
    %190 = vmatprep.subr.mxu0 0.0
    %191 = vmatpush2.msra.mxu0 0.0
    %192 = vmatprep.subr.mxu0 0.0
    %193 = vmatpush2.msra.mxu0 0.0
    %194 = vmatprep.subr.mxu0 0.0
    %195 = vmatpush2.msra.mxu0 0.0
    %196 = vmatprep.subr.mxu0 0.0
    %197 = vmatpush2.msra.mxu0 0.0
    %198 = vmatprep.subr.mxu0 0.0
    %199 = vmatpush2.msra.mxu0 0.0
    %200 = vmatprep.subr.mxu0 0.0
    %201 = vmatpush2.msra.mxu0 0.0
    %202 = vmatprep.subr.mxu0 0.0
    %203 = vmatpush2.msra.mxu0 0.0
    %204 = vmatprep.subr.mxu0 0.0
    %205 = vmatpush2.msra.mxu0 0.0
    %206 = vmatprep.subr.mxu0 0.0
    %207 = vmatpush2.msra.mxu0 0.0
    %208 = vmatprep.mubr.f32.mxu0 0.0
    %209 = vmatmul.mubr.f32.gmra.mxu0 %v99
    %v210 = vpop.f32.mrf.mxu0
    %v211 = vadd.f32 %v137, %v210
    %v212 = vpop.f32.mrf.mxu0
    %v213 = vadd.f32 %v141, %v212
    %214 = vdwg.mxu0
    %v215 = vmax.f32 %v211, 0.0
    %v216 = vmax.f32 %v213, 0.0
    %v217 = vld [vmem:[#allocation7] sm:$0xff]
    %v218 = vld [vmem:[#allocation7 + $0x8] sm:$0xff]
    %v219 = vld [vmem:[#allocation7 + $0x10] sm:$0xff]
    %v220 = vld [vmem:[#allocation7 + $0x18] sm:$0xff]
    %v221 = vld [vmem:[#allocation7 + $0x20] sm:$0xff]
    %v222 = vld [vmem:[#allocation7 + $0x28] sm:$0xff]
    %v223 = vld [vmem:[#allocation7 + $0x30] sm:$0xff]
    %v224 = vld [vmem:[#allocation7 + $0x38] sm:$0xff]
    %v225 = vld [vmem:[#allocation7 + $0x40] sm:$0xff]
    %v226 = vld [vmem:[#allocation7 + $0x48] sm:$0xff]
    %v227 = vld [vmem:[#allocation7 + $0x50] sm:$0xff]
    %v228 = vld [vmem:[#allocation7 + $0x58] sm:$0xff]
    %v229 = vld [vmem:[#allocation7 + $0x60] sm:$0xff]
    %v230 = vld [vmem:[#allocation7 + $0x68] sm:$0xff]
    %v231 = vld [vmem:[#allocation7 + $0x70] sm:$0xff]
    %v232 = vld [vmem:[#allocation7 + $0x78] sm:$0xff]
    %v233 = vld [vmem:[#allocation7 + $0x80] sm:$0xff]
    %v234 = vld [vmem:[#allocation7 + $0x88] sm:$0xff]
    %v235 = vld [vmem:[#allocation7 + $0x90] sm:$0xff]
    %v236 = vld [vmem:[#allocation7 + $0x98] sm:$0xff]
    %v237 = vld [vmem:[#allocation7 + $0xa0] sm:$0xff]
    %v238 = vld [vmem:[#allocation7 + $0xa8] sm:$0xff]
    %v239 = vld [vmem:[#allocation7 + $0xb0] sm:$0xff]
    %v240 = vld [vmem:[#allocation7 + $0xb8] sm:$0xff]
    %v241 = vld [vmem:[#allocation7 + $0xc0] sm:$0xff]
    %v242 = vld [vmem:[#allocation7 + $0xc8] sm:$0xff]
    %v243 = vld [vmem:[#allocation7 + $0xd0] sm:$0xff]
    %v244 = vld [vmem:[#allocation7 + $0xd8] sm:$0xff]
    %v245 = vld [vmem:[#allocation7 + $0xe0] sm:$0xff]
    %v246 = vld [vmem:[#allocation7 + $0xe8] sm:$0xff]
    %v247 = vld [vmem:[#allocation7 + $0xf0] sm:$0xff]
    %v248 = vld [vmem:[#allocation7 + $0xf8] sm:$0xff]
    %v249 = vld [vmem:[#allocation7 + $0x100] sm:$0xff]
    %v250 = vld [vmem:[#allocation7 + $0x108] sm:$0xff]
    %v251 = vld [vmem:[#allocation7 + $0x110] sm:$0xff]
    %v252 = vld [vmem:[#allocation7 + $0x118] sm:$0xff]
    %v253 = vld [vmem:[#allocation7 + $0x120] sm:$0xff]
    %v254 = vld [vmem:[#allocation7 + $0x128] sm:$0xff]
    %v255 = vld [vmem:[#allocation7 + $0x130] sm:$0xff]
    %v256 = vld [vmem:[#allocation7 + $0x138] sm:$0xff]
    %v257 = vld [vmem:[#allocation7 + $0x140] sm:$0xff]
    %v258 = vld [vmem:[#allocation7 + $0x148] sm:$0xff]
    %v259 = vld [vmem:[#allocation7 + $0x150] sm:$0xff]
    %v260 = vld [vmem:[#allocation7 + $0x158] sm:$0xff]
    %v261 = vld [vmem:[#allocation7 + $0x160] sm:$0xff]
    %v262 = vld [vmem:[#allocation7 + $0x168] sm:$0xff]
    %v263 = vld [vmem:[#allocation7 + $0x170] sm:$0xff]
    %v264 = vld [vmem:[#allocation7 + $0x178] sm:$0xff]
    %v265 = vld [vmem:[#allocation7 + $0x180] sm:$0xff]
    %v266 = vld [vmem:[#allocation7 + $0x188] sm:$0xff]
    %v267 = vld [vmem:[#allocation7 + $0x190] sm:$0xff]
    %v268 = vld [vmem:[#allocation7 + $0x198] sm:$0xff]
    %v269 = vld [vmem:[#allocation7 + $0x1a0] sm:$0xff]
    %v270 = vld [vmem:[#allocation7 + $0x1a8] sm:$0xff]
    %v271 = vld [vmem:[#allocation7 + $0x1b0] sm:$0xff]
    %v272 = vld [vmem:[#allocation7 + $0x1b8] sm:$0xff]
    %v273 = vld [vmem:[#allocation7 + $0x1c0] sm:$0xff]
    %v274 = vld [vmem:[#allocation7 + $0x1c8] sm:$0xff]
    %v275 = vld [vmem:[#allocation7 + $0x1d0] sm:$0xff]
    %v276 = vld [vmem:[#allocation7 + $0x1d8] sm:$0xff]
    %v277 = vld [vmem:[#allocation7 + $0x1e0] sm:$0xff]
    %v278 = vld [vmem:[#allocation7 + $0x1e8] sm:$0xff]
    %v279 = vld [vmem:[#allocation7 + $0x1f0] sm:$0xff]
    %v280 = vld [vmem:[#allocation7 + $0x1f8] sm:$0xff]
    %v281 = vld [vmem:[%s4] sm:$0x3]
    %v283 = vlaneseq
    %v284 = vshrl.u32 %v283, 7
    %v285 = vsub.s32 0, %v284
    %v286 = vrot.slane %v281, %v285
    %v287 = vlaneseq
    %v288 = vshrl.u32 %v287, 7
    %v289 = vsub.s32 1, %v288
    %v290 = vrot.slane %v281, %v289
    %293 = vmatprep.subr.mxu0 %v248
    %294 = vmatpush1.msra.mxu0 %v247
    %295 = vmatprep.subr.mxu0 %v246
    %296 = vmatpush1.msra.mxu0 %v245
    %297 = vmatprep.subr.mxu0 %v244
    %298 = vmatpush1.msra.mxu0 %v243
    %299 = vmatprep.subr.mxu0 %v242
    %300 = vmatpush1.msra.mxu0 %v241
    %301 = vmatprep.subr.mxu0 %v240
    %302 = vmatpush1.msra.mxu0 %v239
    %303 = vmatprep.subr.mxu0 %v238
    %304 = vmatpush1.msra.mxu0 %v237
    %305 = vmatprep.subr.mxu0 %v236
    %306 = vmatpush1.msra.mxu0 %v235
    %307 = vmatprep.subr.mxu0 %v234
    %308 = vmatpush1.msra.mxu0 %v233
    %309 = vmatprep.subr.mxu0 %v232
    %310 = vmatpush1.msra.mxu0 %v231
    %311 = vmatprep.subr.mxu0 %v230
    %312 = vmatpush1.msra.mxu0 %v229
    %313 = vmatprep.subr.mxu0 %v228
    %314 = vmatpush1.msra.mxu0 %v227
    %315 = vmatprep.subr.mxu0 %v226
    %316 = vmatpush1.msra.mxu0 %v225
    %317 = vmatprep.subr.mxu0 %v224
    %318 = vmatpush1.msra.mxu0 %v223
    %319 = vmatprep.subr.mxu0 %v222
    %320 = vmatpush1.msra.mxu0 %v221
    %321 = vmatprep.subr.mxu0 %v220
    %322 = vmatpush1.msra.mxu0 %v219
    %323 = vmatprep.subr.mxu0 %v218
    %324 = vmatpush1.msra.mxu0 %v217
    %325 = vmatprep.subr.mxu0 %v280
    %326 = vmatpush2.msra.mxu0 %v279
    %327 = vmatprep.subr.mxu0 %v278
    %328 = vmatpush2.msra.mxu0 %v277
    %329 = vmatprep.subr.mxu0 %v276
    %330 = vmatpush2.msra.mxu0 %v275
    %331 = vmatprep.subr.mxu0 %v274
    %332 = vmatpush2.msra.mxu0 %v273
    %333 = vmatprep.subr.mxu0 %v272
    %334 = vmatpush2.msra.mxu0 %v271
    %335 = vmatprep.subr.mxu0 %v270
    %336 = vmatpush2.msra.mxu0 %v269
    %337 = vmatprep.subr.mxu0 %v268
    %338 = vmatpush2.msra.mxu0 %v267
    %339 = vmatprep.subr.mxu0 %v266
    %340 = vmatpush2.msra.mxu0 %v265
    %341 = vmatprep.subr.mxu0 %v264
    %342 = vmatpush2.msra.mxu0 %v263
    %343 = vmatprep.subr.mxu0 %v262
    %344 = vmatpush2.msra.mxu0 %v261
    %345 = vmatprep.subr.mxu0 %v260
    %346 = vmatpush2.msra.mxu0 %v259
    %347 = vmatprep.subr.mxu0 %v258
    %348 = vmatpush2.msra.mxu0 %v257
    %349 = vmatprep.subr.mxu0 %v256
    %350 = vmatpush2.msra.mxu0 %v255
    %351 = vmatprep.subr.mxu0 %v254
    %352 = vmatpush2.msra.mxu0 %v253
    %353 = vmatprep.subr.mxu0 %v252
    %354 = vmatpush2.msra.mxu0 %v251
    %355 = vmatprep.subr.mxu0 %v250
    %356 = vmatpush2.msra.mxu0 %v249
    %357 = vmatprep.mubr.f32.mxu0 %v216
    %358 = vmatmul.mubr.f32.gmra.mxu0 %v215
    %v359 = vpop.f32.mrf.mxu0
    %v360 = vadd.f32 %v286, %v359
    %v361 = vpop.f32.mrf.mxu0
    %v362 = vadd.f32 %v290, %v361
    %363 = vdwg.mxu0
    %v364 = vmax.f32 %v360, 0.0
    %v365 = vmax.f32 %v362, 0.0
    %v366 = vld [vmem:[#allocation8] sm:$0xff]
    %v367 = vld [vmem:[#allocation8 + $0x8] sm:$0xff]
    %v368 = vld [vmem:[#allocation8 + $0x10] sm:$0xff]
    %v369 = vld [vmem:[#allocation8 + $0x18] sm:$0xff]
    %v370 = vld [vmem:[#allocation8 + $0x20] sm:$0xff]
    %v371 = vld [vmem:[#allocation8 + $0x28] sm:$0xff]
    %v372 = vld [vmem:[#allocation8 + $0x30] sm:$0xff]
    %v373 = vld [vmem:[#allocation8 + $0x38] sm:$0xff]
    %v374 = vld [vmem:[#allocation8 + $0x40] sm:$0xff]
    %v375 = vld [vmem:[#allocation8 + $0x48] sm:$0xff]
    %v376 = vld [vmem:[#allocation8 + $0x50] sm:$0xff]
    %v377 = vld [vmem:[#allocation8 + $0x58] sm:$0xff]
    %v378 = vld [vmem:[#allocation8 + $0x60] sm:$0xff]
    %v379 = vld [vmem:[#allocation8 + $0x68] sm:$0xff]
    %v380 = vld [vmem:[#allocation8 + $0x70] sm:$0xff]
    %v381 = vld [vmem:[#allocation8 + $0x78] sm:$0xff]
    %v382 = vld [vmem:[#allocation8 + $0x80] sm:$0xff]
    %v383 = vld [vmem:[#allocation8 + $0x88] sm:$0xff]
    %v384 = vld [vmem:[#allocation8 + $0x90] sm:$0xff]
    %v385 = vld [vmem:[#allocation8 + $0x98] sm:$0xff]
    %v386 = vld [vmem:[#allocation8 + $0xa0] sm:$0xff]
    %v387 = vld [vmem:[#allocation8 + $0xa8] sm:$0xff]
    %v388 = vld [vmem:[#allocation8 + $0xb0] sm:$0xff]
    %v389 = vld [vmem:[#allocation8 + $0xb8] sm:$0xff]
    %v390 = vld [vmem:[#allocation8 + $0xc0] sm:$0xff]
    %v391 = vld [vmem:[#allocation8 + $0xc8] sm:$0xff]
    %v392 = vld [vmem:[#allocation8 + $0xd0] sm:$0xff]
    %v393 = vld [vmem:[#allocation8 + $0xd8] sm:$0xff]
    %v394 = vld [vmem:[#allocation8 + $0xe0] sm:$0xff]
    %v395 = vld [vmem:[#allocation8 + $0xe8] sm:$0xff]
    %v396 = vld [vmem:[#allocation8 + $0xf0] sm:$0xff]
    %v397 = vld [vmem:[#allocation8 + $0xf8] sm:$0xff]
    %v398 = vld [vmem:[#allocation8 + $0x100] sm:$0xff]
    %v399 = vld [vmem:[#allocation8 + $0x108] sm:$0xff]
    %v400 = vld [vmem:[#allocation8 + $0x110] sm:$0xff]
    %v401 = vld [vmem:[#allocation8 + $0x118] sm:$0xff]
    %v402 = vld [vmem:[#allocation8 + $0x120] sm:$0xff]
    %v403 = vld [vmem:[#allocation8 + $0x128] sm:$0xff]
    %v404 = vld [vmem:[#allocation8 + $0x130] sm:$0xff]
    %v405 = vld [vmem:[#allocation8 + $0x138] sm:$0xff]
    %v406 = vld [vmem:[#allocation8 + $0x140] sm:$0xff]
    %v407 = vld [vmem:[#allocation8 + $0x148] sm:$0xff]
    %v408 = vld [vmem:[#allocation8 + $0x150] sm:$0xff]
    %v409 = vld [vmem:[#allocation8 + $0x158] sm:$0xff]
    %v410 = vld [vmem:[#allocation8 + $0x160] sm:$0xff]
    %v411 = vld [vmem:[#allocation8 + $0x168] sm:$0xff]
    %v412 = vld [vmem:[#allocation8 + $0x170] sm:$0xff]
    %v413 = vld [vmem:[#allocation8 + $0x178] sm:$0xff]
    %v414 = vld [vmem:[#allocation8 + $0x180] sm:$0xff]
    %v415 = vld [vmem:[#allocation8 + $0x188] sm:$0xff]
    %v416 = vld [vmem:[#allocation8 + $0x190] sm:$0xff]
    %v417 = vld [vmem:[#allocation8 + $0x198] sm:$0xff]
    %v418 = vld [vmem:[#allocation8 + $0x1a0] sm:$0xff]
    %v419 = vld [vmem:[#allocation8 + $0x1a8] sm:$0xff]
    %v420 = vld [vmem:[#allocation8 + $0x1b0] sm:$0xff]
    %v421 = vld [vmem:[#allocation8 + $0x1b8] sm:$0xff]
    %v422 = vld [vmem:[#allocation8 + $0x1c0] sm:$0xff]
    %v423 = vld [vmem:[#allocation8 + $0x1c8] sm:$0xff]
    %v424 = vld [vmem:[#allocation8 + $0x1d0] sm:$0xff]
    %v425 = vld [vmem:[#allocation8 + $0x1d8] sm:$0xff]
    %v426 = vld [vmem:[#allocation8 + $0x1e0] sm:$0xff]
    %v427 = vld [vmem:[#allocation8 + $0x1e8] sm:$0xff]
    %v428 = vld [vmem:[#allocation8 + $0x1f0] sm:$0xff]
    %v429 = vld [vmem:[#allocation8 + $0x1f8] sm:$0xff]
    %v430 = vld [vmem:[%s6] sm:$0x3]
    %v432 = vlaneseq
    %v433 = vshrl.u32 %v432, 7
    %v434 = vsub.s32 0, %v433
    %v435 = vrot.slane %v430, %v434
    %v436 = vlaneseq
    %v437 = vshrl.u32 %v436, 7
    %v438 = vsub.s32 1, %v437
    %v439 = vrot.slane %v430, %v438
    %442 = vmatprep.subr.mxu0 %v397
    %443 = vmatpush1.msra.mxu0 %v396
    %444 = vmatprep.subr.mxu0 %v395
    %445 = vmatpush1.msra.mxu0 %v394
    %446 = vmatprep.subr.mxu0 %v393
    %447 = vmatpush1.msra.mxu0 %v392
    %448 = vmatprep.subr.mxu0 %v391
    %449 = vmatpush1.msra.mxu0 %v390
    %450 = vmatprep.subr.mxu0 %v389
    %451 = vmatpush1.msra.mxu0 %v388
    %452 = vmatprep.subr.mxu0 %v387
    %453 = vmatpush1.msra.mxu0 %v386
    %454 = vmatprep.subr.mxu0 %v385
    %455 = vmatpush1.msra.mxu0 %v384
    %456 = vmatprep.subr.mxu0 %v383
    %457 = vmatpush1.msra.mxu0 %v382
    %458 = vmatprep.subr.mxu0 %v381
    %459 = vmatpush1.msra.mxu0 %v380
    %460 = vmatprep.subr.mxu0 %v379
    %461 = vmatpush1.msra.mxu0 %v378
    %462 = vmatprep.subr.mxu0 %v377
    %463 = vmatpush1.msra.mxu0 %v376
    %464 = vmatprep.subr.mxu0 %v375
    %465 = vmatpush1.msra.mxu0 %v374
    %466 = vmatprep.subr.mxu0 %v373
    %467 = vmatpush1.msra.mxu0 %v372
    %468 = vmatprep.subr.mxu0 %v371
    %469 = vmatpush1.msra.mxu0 %v370
    %470 = vmatprep.subr.mxu0 %v369
    %471 = vmatpush1.msra.mxu0 %v368
    %472 = vmatprep.subr.mxu0 %v367
    %473 = vmatpush1.msra.mxu0 %v366
    %474 = vmatprep.subr.mxu0 %v429
    %475 = vmatpush2.msra.mxu0 %v428
    %476 = vmatprep.subr.mxu0 %v427
    %477 = vmatpush2.msra.mxu0 %v426
    %478 = vmatprep.subr.mxu0 %v425
    %479 = vmatpush2.msra.mxu0 %v424
    %480 = vmatprep.subr.mxu0 %v423
    %481 = vmatpush2.msra.mxu0 %v422
    %482 = vmatprep.subr.mxu0 %v421
    %483 = vmatpush2.msra.mxu0 %v420
    %484 = vmatprep.subr.mxu0 %v419
    %485 = vmatpush2.msra.mxu0 %v418
    %486 = vmatprep.subr.mxu0 %v417
    %487 = vmatpush2.msra.mxu0 %v416
    %488 = vmatprep.subr.mxu0 %v415
    %489 = vmatpush2.msra.mxu0 %v414
    %490 = vmatprep.subr.mxu0 %v413
    %491 = vmatpush2.msra.mxu0 %v412
    %492 = vmatprep.subr.mxu0 %v411
    %493 = vmatpush2.msra.mxu0 %v410
    %494 = vmatprep.subr.mxu0 %v409
    %495 = vmatpush2.msra.mxu0 %v408
    %496 = vmatprep.subr.mxu0 %v407
    %497 = vmatpush2.msra.mxu0 %v406
    %498 = vmatprep.subr.mxu0 %v405
    %499 = vmatpush2.msra.mxu0 %v404
    %500 = vmatprep.subr.mxu0 %v403
    %501 = vmatpush2.msra.mxu0 %v402
    %502 = vmatprep.subr.mxu0 %v401
    %503 = vmatpush2.msra.mxu0 %v400
    %504 = vmatprep.subr.mxu0 %v399
    %505 = vmatpush2.msra.mxu0 %v398
    %506 = vmatprep.mubr.f32.mxu0 %v365
    %507 = vmatmul.mubr.f32.gmra.mxu0 %v364
    %v508 = vpop.f32.mrf.mxu0
    %v509 = vadd.f32 %v435, %v508
    %v510 = vpop.f32.mrf.mxu0
    %v511 = vadd.f32 %v439, %v510
    %512 = vdwg.mxu0
    %v513 = vmax.f32 %v509, 0.0
    %v514 = vmax.f32 %v511, 0.0
    %v515 = vld [vmem:[#allocation10] sm:$0xff]
    %v516 = vld [vmem:[#allocation10 + $0x8] sm:$0xff]
    %v517 = vld [vmem:[#allocation10 + $0x10] sm:$0xff]
    %v518 = vld [vmem:[#allocation10 + $0x18] sm:$0xff]
    %v519 = vld [vmem:[#allocation10 + $0x20] sm:$0xff]
    %v520 = vld [vmem:[#allocation10 + $0x28] sm:$0xff]
    %v521 = vld [vmem:[#allocation10 + $0x30] sm:$0xff]
    %v522 = vld [vmem:[#allocation10 + $0x38] sm:$0xff]
    %v523 = vld [vmem:[#allocation10 + $0x40] sm:$0xff]
    %v524 = vld [vmem:[#allocation10 + $0x48] sm:$0xff]
    %v525 = vld [vmem:[#allocation10 + $0x50] sm:$0xff]
    %v526 = vld [vmem:[#allocation10 + $0x58] sm:$0xff]
    %v527 = vld [vmem:[#allocation10 + $0x60] sm:$0xff]
    %v528 = vld [vmem:[#allocation10 + $0x68] sm:$0xff]
    %v529 = vld [vmem:[#allocation10 + $0x70] sm:$0xff]
    %v530 = vld [vmem:[#allocation10 + $0x78] sm:$0xff]
    %v531 = vld [vmem:[#allocation10 + $0x80] sm:$0xff]
    %v532 = vld [vmem:[#allocation10 + $0x88] sm:$0xff]
    %v533 = vld [vmem:[#allocation10 + $0x90] sm:$0xff]
    %v534 = vld [vmem:[#allocation10 + $0x98] sm:$0xff]
    %v535 = vld [vmem:[#allocation10 + $0xa0] sm:$0xff]
    %v536 = vld [vmem:[#allocation10 + $0xa8] sm:$0xff]
    %v537 = vld [vmem:[#allocation10 + $0xb0] sm:$0xff]
    %v538 = vld [vmem:[#allocation10 + $0xb8] sm:$0xff]
    %v539 = vld [vmem:[#allocation10 + $0xc0] sm:$0xff]
    %v540 = vld [vmem:[#allocation10 + $0xc8] sm:$0xff]
    %v541 = vld [vmem:[#allocation10 + $0xd0] sm:$0xff]
    %v542 = vld [vmem:[#allocation10 + $0xd8] sm:$0xff]
    %v543 = vld [vmem:[#allocation10 + $0xe0] sm:$0xff]
    %v544 = vld [vmem:[#allocation10 + $0xe8] sm:$0xff]
    %v545 = vld [vmem:[#allocation10 + $0xf0] sm:$0xff]
    %v546 = vld [vmem:[#allocation10 + $0xf8] sm:$0xff]
    %v547 = vld [vmem:[%s8] sm:$0x1]
    %v549 = vlaneseq
    %v550 = vshrl.u32 %v549, 7
    %v551 = vsub.s32 0, %v550
    %v552 = vrot.slane %v547, %v551
    %554 = vmatprep.subr.mxu0 0.0
    %555 = vmatpush1.msra.mxu0 %v530
    %556 = vmatprep.subr.mxu0 0.0
    %557 = vmatpush1.msra.mxu0 %v529
    %558 = vmatprep.subr.mxu0 0.0
    %559 = vmatpush1.msra.mxu0 %v528
    %560 = vmatprep.subr.mxu0 0.0
    %561 = vmatpush1.msra.mxu0 %v527
    %562 = vmatprep.subr.mxu0 0.0
    %563 = vmatpush1.msra.mxu0 %v526
    %564 = vmatprep.subr.mxu0 0.0
    %565 = vmatpush1.msra.mxu0 %v525
    %566 = vmatprep.subr.mxu0 0.0
    %567 = vmatpush1.msra.mxu0 %v524
    %568 = vmatprep.subr.mxu0 0.0
    %569 = vmatpush1.msra.mxu0 %v523
    %570 = vmatprep.subr.mxu0 0.0
    %571 = vmatpush1.msra.mxu0 %v522
    %572 = vmatprep.subr.mxu0 0.0
    %573 = vmatpush1.msra.mxu0 %v521
    %574 = vmatprep.subr.mxu0 0.0
    %575 = vmatpush1.msra.mxu0 %v520
    %576 = vmatprep.subr.mxu0 0.0
    %577 = vmatpush1.msra.mxu0 %v519
    %578 = vmatprep.subr.mxu0 0.0
    %579 = vmatpush1.msra.mxu0 %v518
    %580 = vmatprep.subr.mxu0 0.0
    %581 = vmatpush1.msra.mxu0 %v517
    %582 = vmatprep.subr.mxu0 0.0
    %583 = vmatpush1.msra.mxu0 %v516
    %584 = vmatprep.subr.mxu0 0.0
    %585 = vmatpush1.msra.mxu0 %v515
    %586 = vmatprep.subr.mxu0 0.0
    %587 = vmatpush2.msra.mxu0 %v546
    %588 = vmatprep.subr.mxu0 0.0
    %589 = vmatpush2.msra.mxu0 %v545
    %590 = vmatprep.subr.mxu0 0.0
    %591 = vmatpush2.msra.mxu0 %v544
    %592 = vmatprep.subr.mxu0 0.0
    %593 = vmatpush2.msra.mxu0 %v543
    %594 = vmatprep.subr.mxu0 0.0
    %595 = vmatpush2.msra.mxu0 %v542
    %596 = vmatprep.subr.mxu0 0.0
    %597 = vmatpush2.msra.mxu0 %v541
    %598 = vmatprep.subr.mxu0 0.0
    %599 = vmatpush2.msra.mxu0 %v540
    %600 = vmatprep.subr.mxu0 0.0
    %601 = vmatpush2.msra.mxu0 %v539
    %602 = vmatprep.subr.mxu0 0.0
    %603 = vmatpush2.msra.mxu0 %v538
    %604 = vmatprep.subr.mxu0 0.0
    %605 = vmatpush2.msra.mxu0 %v537
    %606 = vmatprep.subr.mxu0 0.0
    %607 = vmatpush2.msra.mxu0 %v536
    %608 = vmatprep.subr.mxu0 0.0
    %609 = vmatpush2.msra.mxu0 %v535
    %610 = vmatprep.subr.mxu0 0.0
    %611 = vmatpush2.msra.mxu0 %v534
    %612 = vmatprep.subr.mxu0 0.0
    %613 = vmatpush2.msra.mxu0 %v533
    %614 = vmatprep.subr.mxu0 0.0
    %615 = vmatpush2.msra.mxu0 %v532
    %616 = vmatprep.subr.mxu0 0.0
    %617 = vmatpush2.msra.mxu0 %v531
    %618 = vmatprep.mubr.f32.mxu0 %v514
    %619 = vmatmul.mubr.f32.gmra.mxu0 %v513
    %v620 = vpop.f32.mrf.mxu0
    %v621 = vadd.f32 %v552, %v620
    %v622 = vpop.f32.mrf.mxu0
    %623 = vdwg.mxu0
    %624 = vst [vmem:[#allocation11] sm:$0xff] %v621
    // Predicated region
    $region58: #{tpu_custom_call.1} parent=1 // pred_check
      _
    $region59: #{tpu_custom_call.1} parent=1 // pred_check_branch
      %626 = sbr.rel (0) target = $region61
    $region60: #{tpu_custom_call.1} parent=1 // pred_region
      %s628 = ssub.s32 128, 128
      %629 = vsyncadd [#allocation4], %s628
      %s631 = sshll.u32 [#allocation11], 4
      %s632 = int_to_ptr.vmem [resolvable:$true] %s631
      %634 = dma.vmem_to_hbm [thread:$0]  %s632, 128, %s9, [#allocation4]
    $region61: #{tpu_custom_call.1} parent=1 // pred_fallthru
      _
    // Predicated region
    $region62: #{tpu_custom_call.1} parent=1 // pred_check
      _
    $region63: #{tpu_custom_call.1} parent=1 // pred_check_branch
      %636 = sbr.rel (0) target = $region65
    $region64: #{tpu_custom_call.1} parent=1 // pred_region
      %637 = dma.done [#allocation4], 128
    $region65: #{tpu_custom_call.1} parent=1 // pred_fallthru
      _
    %638 = vsyncpa [#allocation3], 1
    %639 = vsyncpa [#allocation6], 1
    %640 = vsyncpa [#allocation9], 1
    %641 = vsyncpa [#allocation4], 1

</llo_original>
